<compile_context>
chip_gen: v5e
topology: v5e:2x2
jax: 0.10.0
libtpu: 0.0.40
codegen_flags: <defaults>
</compile_context>

<pallas_src>
import jax
import jax.numpy as jnp
from jax.experimental import pallas as pl
from jax.experimental.pallas import tpu as pltpu


def _self_attn_kernel(x_ref, w_ref, m_ref, o_ref):
    # x_ref: (Bt*L, H) native dtype; w_ref: (H, 1) native dtype;
    # m_ref: (Bt, L) int32 (nonzero = masked); o_ref: (Bt, L) f32.
    bt, l = o_ref.shape
    # H-contraction on the MXU with f32 accumulation; result is tiny: (Bt*L, 1).
    scores = jnp.dot(x_ref[...], w_ref[...], preferred_element_type=jnp.float32)
    scores = scores.reshape(bt, l)
    # Masked softmax over L. (A fully masked row gives NaN, exactly like the
    # PyTorch module.)  Garbage rows of a ragged last block are computed but
    # their stores are masked by Pallas, so they never reach HBM.
    scores = jnp.where(m_ref[...] != 0, -jnp.inf, scores)
    mx = jnp.max(scores, axis=1, keepdims=True)
    e = jnp.exp(scores - mx)
    o_ref[...] = (e / jnp.sum(e, axis=1, keepdims=True)).astype(o_ref.dtype)


def self_attention_layer(q_hiddens, q_mask, weight, bias=None, *,
                         target_block_bytes=8 * 1024 * 1024):
    """q_hiddens: (B, L, H) float (f32 or bf16); q_mask: (B, L), nonzero = masked;
    weight: (1, H); bias: (1,) accepted for API parity but unused (softmax is
    shift-invariant per row, so the Linear bias has no effect on alpha).
    Returns alpha: (B, L) f32."""
    del bias
    B, L, H = q_hiddens.shape
    dtype = q_hiddens.dtype
    itemsize = jnp.dtype(dtype).itemsize

    # Wrapper-side flatten: free metadata op on contiguous HBM.  Keeps each block's
    # DMA a single contiguous leading-axis slice and guarantees the MXU path.
    x2d = q_hiddens.reshape(B * L, H)
    w = weight.reshape(H, 1).astype(dtype)
    mask = q_mask.astype(jnp.int32)

    # --- batch tiling sized against the real VMEM layout, not raw bytes ---------
    lane_h = pl.cdiv(H, 128) * 128                          # lanes pad to 128
    sublane = 8 * max(1, 4 // itemsize)                     # 8 f32 / 16 bf16
    row_vmem = pl.cdiv(L, sublane) * sublane * lane_h * itemsize   # bytes per batch row

    rows = max(1, target_block_bytes // row_vmem)
    if rows >= B:
        Bt = B                                              # single tile over batch
    else:
        Bt = max(8, (rows // 8) * 8)                        # (Bt, L) blocks need Bt % 8 == 0
        if Bt >= B:
            Bt = B
    grid = pl.cdiv(B, Bt)                                   # ragged edge handled by Pallas

    # Scoped-VMEM budget: double-buffered x blocks + small mask/out blocks + slack.
    aux_vmem = 2 * 2 * (pl.cdiv(Bt, 8) * 8) * (pl.cdiv(L, 128) * 128) * 4
    vmem_limit = int(max(32 << 20, 2 * Bt * row_vmem + aux_vmem + (2 << 20)))

    cost = pl.CostEstimate(
        flops=2 * B * L * H,
        transcendentals=B * L,
        bytes_accessed=B * L * H * itemsize + 2 * B * L * 4 + H * itemsize,
    )

    grid_spec = pltpu.PrefetchScalarGridSpec(
        num_scalar_prefetch=0,
        grid=(grid,),
        in_specs=[
            pl.BlockSpec((Bt * L, H), lambda i: (i, 0)),    # hiddens, flattened
            pl.BlockSpec((H, 1), lambda i: (0, 0)),         # weight, stays resident
            pl.BlockSpec((Bt, L), lambda i: (i, 0)),        # mask
        ],
        out_specs=pl.BlockSpec((Bt, L), lambda i: (i, 0)),
    )

    out = pl.pallas_call(
        _self_attn_kernel,
        out_shape=jax.ShapeDtypeStruct((B, L), jnp.float32),
        grid_spec=grid_spec,
        compiler_params=pltpu.CompilerParams(
            dimension_semantics=("parallel",),              # batch tiles split over TCs
            vmem_limit_bytes=vmem_limit,
        ),
        cost_estimate=cost,
    )(x2d, w, mask)
    return out


if __name__ == "__main__":
    # Small shapes consistent with the module's forward:
    # batch=2, max_question_length=8, question_hidden_size=32
    B, L, H = 2, 8, 32
    key = jax.random.PRNGKey(0)
    k_x, k_w, k_b, _ = jax.random.split(key, 4)

    q_hiddens = jax.random.normal(k_x, (B, L, H), dtype=jnp.float32)
    # Deterministic mask: last 3 positions of batch 0 and last position of batch 1
    # are masked (never a fully-masked row).
    q_mask = jnp.zeros((B, L), dtype=jnp.int32)
    q_mask = q_mask.at[0, L - 3:].set(1)
    q_mask = q_mask.at[1, L - 1:].set(1)

    # nn.Linear(H, 1) parameters, initialized deterministically in-script.
    weight = (jax.random.uniform(k_w, (1, H), dtype=jnp.float32) - 0.5) * 0.2
    bias = (jax.random.uniform(k_b, (1,), dtype=jnp.float32) - 0.5) * 0.2

    alpha = self_attention_layer(q_hiddens, q_mask, weight, bias)
    alpha = jax.block_until_ready(alpha)

    # Plain-JAX reference of the same math (bias included; softmax is
    # shift-invariant so it does not change alpha).
    scores_ref = jnp.sum(q_hiddens * weight[0][None, None, :], axis=-1) + bias[0]
    scores_ref = jnp.where(q_mask != 0, -jnp.inf, scores_ref)
    alpha_ref = jax.nn.softmax(scores_ref, axis=1)

    assert alpha.shape == (B, L)
    assert jnp.allclose(jnp.sum(alpha, axis=1), 1.0, atol=1e-5)
    assert jnp.allclose(alpha, alpha_ref, atol=1e-3, rtol=1e-3)

    print("KERNEL_OK")
</pallas_src>

<mosaic_0001>
module attributes {stable_mosaic.version = 11 : i64} {
  func.func @_self_attn_kernel(%arg0: i32, %arg1: memref<16x32xf32, #tpu.memory_space<vmem>>, %arg2: memref<32x1xf32, #tpu.memory_space<vmem>>, %arg3: memref<2x8xi32, #tpu.memory_space<vmem>>, %arg4: memref<2x8xf32, #tpu.memory_space<vmem>>) attributes {dimension_semantics = [#tpu.dimension_semantics<parallel>], iteration_bounds = array<i64: 1>, scalar_prefetch = 0 : i64, scratch_operands = 0 : i64, tpu.core_type = #tpu.core_type<tc>, window_params = [{transform_indices = @transform_0, window_bounds = array<i64: 16, 32>}, {pipeline_mode = #tpu.pipeline_mode<synchronous>, transform_indices = @transform_1, window_bounds = array<i64: 32, 1>}, {transform_indices = @transform_2, window_bounds = array<i64: 2, 8>}, {transform_indices = @transform_3, window_bounds = array<i64: 2, 8>}]} {
    %c0 = arith.constant 0 : index
    %c0_0 = arith.constant 0 : index
    %0 = vector.load %arg1[%c0, %c0_0] : memref<16x32xf32, #tpu.memory_space<vmem>>, vector<16x32xf32>
    %c0_1 = arith.constant 0 : index
    %c0_2 = arith.constant 0 : index
    %1 = vector.load %arg2[%c0_1, %c0_2] : memref<32x1xf32, #tpu.memory_space<vmem>>, vector<32x1xf32>
    %cst = arith.constant dense<0.000000e+00> : vector<16x1xf32>
    %2 = tpu.matmul %0, %1, %cst {dimension_numbers = #tpu.dot_dimension_numbers<[1], [0], [0], [1], [0, 0, 1, 1], [], []>} : vector<16x32xf32>, vector<32x1xf32>, vector<16x1xf32> -> vector<16x1xf32>
    %3 = vector.shape_cast %2 : vector<16x1xf32> to vector<2x8xf32>
    %c0_3 = arith.constant 0 : index
    %c0_4 = arith.constant 0 : index
    %4 = vector.load %arg3[%c0_3, %c0_4] : memref<2x8xi32, #tpu.memory_space<vmem>>, vector<2x8xi32>
    %c0_i32 = arith.constant 0 : i32
    %5 = vector.broadcast %c0_i32 : i32 to vector<2x8xi32>
    %6 = arith.cmpi ne, %4, %5 : vector<2x8xi32>
    %cst_5 = arith.constant 0xFF800000 : f32
    %7 = vector.broadcast %cst_5 : f32 to vector<2x8xf32>
    %8 = arith.select %6, %7, %3 : vector<2x8xi1>, vector<2x8xf32>
    %cst_6 = arith.constant dense<0xFF800000> : vector<2xf32>
    %9 = vector.multi_reduction <maximumf>, %8, %cst_6 [1] : vector<2x8xf32> to vector<2xf32>
    %10 = vector.shape_cast %9 : vector<2xf32> to vector<2x1xf32>
    %11 = vector.broadcast %10 : vector<2x1xf32> to vector<2x8xf32>
    %12 = arith.subf %8, %11 : vector<2x8xf32>
    %13 = math.exp %12 : vector<2x8xf32>
    %cst_7 = arith.constant dense<0.000000e+00> : vector<2xf32>
    %14 = vector.multi_reduction <add>, %13, %cst_7 [1] : vector<2x8xf32> to vector<2xf32>
    %15 = vector.shape_cast %14 : vector<2xf32> to vector<2x1xf32>
    %16 = vector.broadcast %15 : vector<2x1xf32> to vector<2x8xf32>
    %17 = arith.divf %13, %16 : vector<2x8xf32>
    %c0_8 = arith.constant 0 : index
    %c0_9 = arith.constant 0 : index
    %18 = vector.load %arg4[%c0_8, %c0_9] : memref<2x8xf32, #tpu.memory_space<vmem>>, vector<2x8xf32>
    tpu.vector_store %arg4[%c0_8, %c0_9], %17 {strides = array<i32>} : memref<2x8xf32, #tpu.memory_space<vmem>>, vector<2x8xf32>,
    return
  }
  func.func @transform_0(%arg0: i32) -> (i32, i32) {
    %c0_i32 = arith.constant 0 : i32
    %c0_i32_0 = arith.constant 0 : i32
    return %arg0, %c0_i32 : i32, i32
  }
  func.func @transform_1(%arg0: i32) -> (i32, i32) {
    %c0_i32 = arith.constant 0 : i32
    %c0_i32_0 = arith.constant 0 : i32
    %c0_i32_1 = arith.constant 0 : i32
    return %c0_i32, %c0_i32_0 : i32, i32
  }
  func.func @transform_2(%arg0: i32) -> (i32, i32) {
    %c0_i32 = arith.constant 0 : i32
    %c0_i32_0 = arith.constant 0 : i32
    return %arg0, %c0_i32 : i32, i32
  }
  func.func @transform_3(%arg0: i32) -> (i32, i32) {
    %c0_i32 = arith.constant 0 : i32
    %c0_i32_0 = arith.constant 0 : i32
    return %arg0, %c0_i32 : i32, i32
  }
}

</mosaic_0001>

<llo_original>
// kernel: tpu_custom_call.1
$region0: #{tpu_custom_call.1}
  #allocation0 [shape = 'u32[]', space=smem, size = 0x4, offset = 0x4, fixed_abs, tag = 'smem constant byte address 0x4 - core index']
  #allocation1 [shape = 'u32[72,128]{1,0:T(1,128)}', space=vmem, size = 0x9000, scoped, tag = 'internal scratch']
  %s0 = inlined_call_operand.vmem [shape: f32[16,32], index: 0, kind: input, shape index: {}]
  %s1 = inlined_call_operand.vmem [shape: f32[32,1], index: 1, kind: input, shape index: {}]
  %s2 = inlined_call_operand.vmem [shape: s32[2,8], index: 2, kind: input, shape index: {}]
  %s3 = inlined_call_operand.hbm [shape: f32[2,8], index: 3, kind: output, shape index: {}]
  %s4 = sld [smem:[#allocation0]]
  $region22: #{tpu_custom_call.1} parent=0
    _
  %s6 = ssub.s32 1, %s4
  %s7 = scalar_select 0, %s6, %s4
  $region1: #{tpu_custom_call.1} parent=0
    #allocation2 [shape = 'u8[1024]{0}', space=vmem, size = 0x400, scoped, tag = 'output window, operand 0, single buffered']
    #allocation3 [shape = 's32[1]{0}', space=sflag, size = 0x4, scoped, tag = 'scoped memory for tpu_custom_call.1']
    %8 = vsyncpa [#allocation3], 0
    // Predicated region
    $region2: #{tpu_custom_call.1} parent=1 // pred_check
      _
    $region3: #{tpu_custom_call.1} parent=1 // pred_check_branch
      %10 = sbr.rel (0) target = $region5
    $region4: #{tpu_custom_call.1} parent=1 // pred_region
      _
    $region5: #{tpu_custom_call.1} parent=1 // pred_fallthru
      _
    // Predicated region
    $region6: #{tpu_custom_call.1} parent=1 // pred_check
      _
    $region7: #{tpu_custom_call.1} parent=1 // pred_check_branch
      %12 = sbr.rel (0) target = $region9
    $region8: #{tpu_custom_call.1} parent=1 // pred_region
      _
    $region9: #{tpu_custom_call.1} parent=1 // pred_fallthru
      _
    // Predicated region
    $region10: #{tpu_custom_call.1} parent=1 // pred_check
      _
    $region11: #{tpu_custom_call.1} parent=1 // pred_check_branch
      %14 = sbr.rel (0) target = $region13
    $region12: #{tpu_custom_call.1} parent=1 // pred_region
      _
    $region13: #{tpu_custom_call.1} parent=1 // pred_fallthru
      _
    %v15 = vld [vmem:[%s0] sm:$0xff]
    %v16 = vld [vmem:[%s0 + $0x8] sm:$0xff]
    %v17 = vld [vmem:[%s1] sm:$0xff]
    %v18 = vld [vmem:[%s1 + $0x8] sm:$0xff]
    %v19 = vld [vmem:[%s1 + $0x10] sm:$0xff]
    %v20 = vld [vmem:[%s1 + $0x18] sm:$0xff]
    %vm21 = vcmask 261120
    %v23 = vsel %vm21, %v15, 0
    %v26 = vsel %vm21, %v16, 0
    %28 = vmatpush.msra.mxu0 0.0
    %29 = vmatpush.msra.mxu0 0.0
    %30 = vmatpush.msra.mxu0 0.0
    %31 = vmatpush.msra.mxu0 0.0
    %32 = vmatpush.msra.mxu0 0.0
    %33 = vmatpush.msra.mxu0 0.0
    %34 = vmatpush.msra.mxu0 0.0
    %35 = vmatpush.msra.mxu0 0.0
    %36 = vmatpush.msra.mxu0 0.0
    %37 = vmatpush.msra.mxu0 0.0
    %38 = vmatpush.msra.mxu0 0.0
    %39 = vmatpush.msra.mxu0 0.0
    %40 = vmatpush.msra.mxu0 %v20
    %41 = vmatpush.msra.mxu0 %v19
    %42 = vmatpush.msra.mxu0 %v18
    %43 = vmatpush.msra.mxu0 %v17
    %44 = vmatmul.f32.gmra.mxu0 %v23
    %v45 = vpop.f32.mrf.mxu0
    %v46 = vadd.f32 0.0, %v45
    %47 = vmatmul.f32.gmra.mxu0 %v26
    %v48 = vpop.f32.mrf.mxu0
    %v49 = vadd.f32 0.0, %v48
    %50 = vdwg.mxu0
    %v51 = vld [vmem:[%s2] sm:$0x3]
    %vm52 = vcmp.ne.s32.totalorder %v51, 0
    %55 = vset.pattern.permute.xlu0 0
    %56 = vperm.xlu0 %55, %v46
    %v57 = vpop.permute.xlu0 %56
    %58 = vset.pattern.permute.xlu0 0
    %59 = vperm.xlu0 %58, %v49
    %v60 = vpop.permute.xlu0 %59
    %v61 = vlaneseq
    %v62 = vand.u32 %v61, 127
    %v63 = vperm.slane %v57, %v62
    %v64 = vperm.slane %v60, %v62
    %vm65 = vcmask 1041409
    %v66 = vsel %vm65, %v64, %v63
    %v68 = vsel %vm52, -inf, %v66
    %vm69 = vcmask 58368
    %v70 = vsel %vm69, %v68, -inf
    %71 = vmax.xlane.f32.xlu0 %v70
    %v72 = vpop.xlane.xlu0 %71
    %v73 = vsub.f32 %v68, %v72
    %v74 = vmul.f32 %v73, 1.442695
    %v75 = vpow.pop %v74
    %v76 = vsel %vm69, %v75, 0.0
    %77 = vadd.xlane.f32.xlu0 %v76
    %v78 = vpop.xlane.xlu0 %77
    %v79 = vrcp.pop %v78
    %v80 = vmul.f32 %v78, %v79
    %v81 = vsub.f32 1.0, %v80
    %v82 = vmul.f32 %v79, %v81
    %v83 = vadd.f32 %v79, %v82
    %vm84 = vweird.f32 %v78
    %vm85 = vweird.f32 %v79
    %vm86 = vmor %vm84, %vm85
    %v87 = vsel %vm86, %v79, %v83
    %v88 = vand.u32 2147483647, %v78
    %vm89 = vcmp.eq.f32.partialorder %v88, 8.507059e+37
    %v90 = vand.u32 %v78, 2147483648
    %v91 = vor.u32 1.1754944e-38, %v90
    %v92 = vsel %vm89, %v91, %v87
    %v93 = vmul.f32 %v75, %v92
    %94 = vst.msk [vmem:[#allocation2] sm:$0x3] %vm69, %v93
    // Predicated region
    $region14: #{tpu_custom_call.1} parent=1 // pred_check
      _
    $region15: #{tpu_custom_call.1} parent=1 // pred_check_branch
      %96 = sbr.rel (0) target = $region17
    $region16: #{tpu_custom_call.1} parent=1 // pred_region
      %98 = vsyncadd [#allocation3], 0
      %s100 = sshll.u32 [#allocation2], 4
      %s101 = int_to_ptr.vmem [resolvable:$true] %s100
      %s102 = sshll.u32 %s3, 4
      %s103 = int_to_ptr.hbm [resolvable:$true] %s102
      %105 = dma.vmem_to_hbm [thread:$0]  %s101, 32, %s103, [#allocation3]
    $region17: #{tpu_custom_call.1} parent=1 // pred_fallthru
      _
    // Predicated region
    $region18: #{tpu_custom_call.1} parent=1 // pred_check
      _
    $region19: #{tpu_custom_call.1} parent=1 // pred_check_branch
      %107 = sbr.rel (0) target = $region21
    $region20: #{tpu_custom_call.1} parent=1 // pred_region
      %109 = dma.done [#allocation3], 32
    $region21: #{tpu_custom_call.1} parent=1 // pred_fallthru
      _
    %110 = vsyncpa [#allocation3], 1

</llo_original>
